<compile_context>
chip_gen: v6e
topology: v6e:2x2x1
jax: 0.10.0
libtpu: 0.0.40
codegen_flags: <defaults>
</compile_context>

<pallas_src>
import jax
import jax.numpy as jnp
from jax.experimental import pallas as pl
from jax.experimental.pallas import tpu as pltpu


def _round_up(n, m):
    return ((n + m - 1) // m) * m


def _cdiv(a, b):
    return (a + b - 1) // b


def _qnet_kernel(x_ref, w0_ref, b0_ref, w3_ref, b3_ref, o_ref):
    # fc0: f32 x is cast to bf16 in-kernel (free VPU work under the matmul),
    # MXU matmul with f32 accumulation; bias + ReLU on the VPU.
    x_bf = x_ref[...].astype(jnp.bfloat16)
    h = jnp.dot(x_bf, w0_ref[...], preferred_element_type=jnp.float32)
    h = jnp.maximum(h + b0_ref[...], 0.0)              # (TB,128) + (1,128)
    # fc3: w3 is zero-padded to 128 N so the MXU RHS is lane-dense; only the
    # first A columns of the (TB,128) result are real.
    out = jnp.dot(h.astype(jnp.bfloat16), w3_ref[...],
                  preferred_element_type=jnp.float32)
    a = o_ref.shape[-1]                                 # static
    o_ref[...] = (out[:, :a] + b3_ref[...]).astype(o_ref.dtype)


def prepare_params(w0, b0, w3, b3):
    """One-time (per optimizer step) parameter prep: bf16 MXU operands and
    lane-dense (128-N-padded) fc3 weight.  Cache the result across forwards."""
    H = w0.shape[1]
    A = w3.shape[1]
    A_mxu = _round_up(A, 128)
    w0_bf = w0.astype(jnp.bfloat16)
    b0_f = b0.reshape(1, H).astype(jnp.float32)
    w3_bf = jnp.zeros((H, A_mxu), jnp.bfloat16).at[:, :A].set(
        w3.astype(jnp.bfloat16))
    b3_f = b3.reshape(1, A).astype(jnp.float32)
    return w0_bf, b0_f, w3_bf, b3_f


def qnetwork_forward(x, params, *, block_b=2048):
    """Fused fc0 -> ReLU -> fc3.

    x: (B, S) float; params = prepare_params(w0, b0, w3, b3).
    Returns (B, A) float32.
    """
    w0_bf, b0_f, w3_bf, b3_f = params
    x = jnp.asarray(x, jnp.float32)   # mirrors torch.tensor(x).type(FloatTensor)
    B, S = x.shape
    H = w0_bf.shape[1]
    A = b3_f.shape[1]
    A_mxu = w3_bf.shape[1]

    # Balanced batch tiling: at least 2 tiles, and an even tile count, so the
    # "parallel" grid axis can shard across both TensorCores on v7x.  TB is a
    # multiple of 8 sublanes; B_pad overshoots B by < 8 rows per tile.
    num_tiles = max(2, _cdiv(B, block_b))
    if num_tiles % 2:
        num_tiles += 1
    TB = _round_up(_cdiv(B, num_tiles), 8)
    B_pad = num_tiles * TB
    if B_pad != B:
        x = jnp.pad(x, ((0, B_pad - B), (0, 0)))

    flops = 2 * B_pad * (S * H + H * A_mxu)
    bytes_accessed = (B_pad * S * 4          # x (f32 in)
                      + w0_bf.size * 2 + w3_bf.size * 2
                      + b0_f.size * 4 + b3_f.size * 4
                      + B_pad * A * 4)       # output (f32, unpadded lanes)

    out = pl.pallas_call(
        _qnet_kernel,
        out_shape=jax.ShapeDtypeStruct((B_pad, A), jnp.float32),
        grid=(num_tiles,),
        in_specs=[
            # Batch tile streams through VMEM (double-buffered by Pallas).
            pl.BlockSpec((TB, S), lambda i: (i, 0)),
            # Weights/biases: constant block index -> loaded into VMEM once and
            # kept resident across grid steps (no per-step re-DMA).
            pl.BlockSpec((S, H), lambda i: (0, 0)),
            pl.BlockSpec((1, H), lambda i: (0, 0)),
            pl.BlockSpec((H, A_mxu), lambda i: (0, 0)),
            pl.BlockSpec((1, A), lambda i: (0, 0)),
        ],
        # Output block last dim == full array last dim (A), so the HBM store
        # stays one contiguous region per tile and carries no lane padding.
        out_specs=pl.BlockSpec((TB, A), lambda i: (i, 0)),
        compiler_params=pltpu.CompilerParams(
            # Batch tiles are independent -> megacore-shardable on v7x.
            dimension_semantics=("parallel",),
        ),
        cost_estimate=pl.CostEstimate(
            flops=flops, transcendentals=0, bytes_accessed=bytes_accessed),
    )(x, w0_bf, b0_f, w3_bf, b3_f)

    return out[:B]


def init_params(key, state_size, action_size, hidden=128):
    """Deterministic init mimicking nn.Linear (uniform +-1/sqrt(fan_in)).
    Weights are stored transposed: (in_features, out_features)."""
    k0w, k0b, k3w, k3b = jax.random.split(key, 4)
    bound0 = 1.0 / jnp.sqrt(state_size)
    bound3 = 1.0 / jnp.sqrt(hidden)
    w0 = jax.random.uniform(k0w, (state_size, hidden), jnp.float32, -bound0, bound0)
    b0 = jax.random.uniform(k0b, (1, hidden), jnp.float32, -bound0, bound0)
    w3 = jax.random.uniform(k3w, (hidden, action_size), jnp.float32, -bound3, bound3)
    b3 = jax.random.uniform(k3b, (1, action_size), jnp.float32, -bound3, bound3)
    # TODO(synk): fc1/fc2 parameters exist in the PyTorch module but are unused
    # in forward(), so they are intentionally not materialized here.
    return w0, b0, w3, b3


if __name__ == "__main__":
    state_size = 8
    action_size = 4

    key = jax.random.PRNGKey(0)
    kx, kp, kx2 = jax.random.split(key, 3)
    w0, b0, w3, b3 = init_params(kp, state_size, action_size)
    params = prepare_params(w0, b0, w3, b3)   # cached across forward calls

    def ref_bf16(x):
        # Reference with matching bf16 MXU operand casts (f32 accumulation).
        h = jnp.maximum(
            jnp.dot(x.astype(jnp.bfloat16), w0.astype(jnp.bfloat16),
                    preferred_element_type=jnp.float32) + b0, 0.0)
        return jnp.dot(h.astype(jnp.bfloat16), w3.astype(jnp.bfloat16),
                       preferred_element_type=jnp.float32) + b3

    def ref_f32(x):
        return jnp.maximum(x @ w0 + b0, 0.0) @ w3 + b3

    # Small RL-style batch (module-implied shape).
    x_small = jax.random.normal(kx, (2, state_size), jnp.float32)
    out_small = jax.block_until_ready(qnetwork_forward(x_small, params))
    assert out_small.shape == (2, action_size)
    assert jnp.allclose(out_small, ref_bf16(x_small), atol=1e-3, rtol=1e-3)
    assert jnp.allclose(out_small, ref_f32(x_small), atol=1e-1, rtol=5e-2)

    # Non-multiple batch to exercise the balanced-tiling / padding / slice path.
    x_big = jax.random.normal(kx2, (300, state_size), jnp.float32)
    out_big = jax.block_until_ready(qnetwork_forward(x_big, params, block_b=128))
    assert out_big.shape == (300, action_size)
    assert jnp.allclose(out_big, ref_bf16(x_big), atol=1e-3, rtol=1e-3)
    assert jnp.allclose(out_big, ref_f32(x_big), atol=1e-1, rtol=5e-2)

    print("KERNEL_OK")
</pallas_src>

<mosaic_0001>
module attributes {stable_mosaic.version = 11 : i64} {
  func.func @_qnet_kernel(%arg0: i32, %arg1: memref<8x8xf32, #tpu.memory_space<vmem>>, %arg2: memref<8x128xbf16, #tpu.memory_space<vmem>>, %arg3: memref<1x128xf32, #tpu.memory_space<vmem>>, %arg4: memref<128x128xbf16, #tpu.memory_space<vmem>>, %arg5: memref<1x4xf32, #tpu.memory_space<vmem>>, %arg6: memref<8x4xf32, #tpu.memory_space<vmem>>) attributes {dimension_semantics = [#tpu.dimension_semantics<parallel>], iteration_bounds = array<i64: 2>, scalar_prefetch = 0 : i64, scratch_operands = 0 : i64, tpu.core_type = #tpu.core_type<tc>, window_params = [{transform_indices = @transform_0, window_bounds = array<i64: 8, 8>}, {pipeline_mode = #tpu.pipeline_mode<synchronous>, transform_indices = @transform_1, window_bounds = array<i64: 8, 128>}, {pipeline_mode = #tpu.pipeline_mode<synchronous>, transform_indices = @transform_2, window_bounds = array<i64: 1, 128>}, {pipeline_mode = #tpu.pipeline_mode<synchronous>, transform_indices = @transform_3, window_bounds = array<i64: 128, 128>}, {pipeline_mode = #tpu.pipeline_mode<synchronous>, transform_indices = @transform_4, window_bounds = array<i64: 1, 4>}, {transform_indices = @transform_5, window_bounds = array<i64: 8, 4>}]} {
    %c0 = arith.constant 0 : index
    %c0_0 = arith.constant 0 : index
    %0 = vector.load %arg1[%c0, %c0_0] : memref<8x8xf32, #tpu.memory_space<vmem>>, vector<8x8xf32>
    %1 = arith.truncf %0 : vector<8x8xf32> to vector<8x8xbf16>
    %c0_1 = arith.constant 0 : index
    %c0_2 = arith.constant 0 : index
    %2 = vector.load %arg2[%c0_1, %c0_2] : memref<8x128xbf16, #tpu.memory_space<vmem>>, vector<8x128xbf16>
    %cst = arith.constant dense<0.000000e+00> : vector<8x128xf32>
    %3 = tpu.matmul %1, %2, %cst {dimension_numbers = #tpu.dot_dimension_numbers<[1], [0], [0], [1], [0, 0, 1, 1], [], []>} : vector<8x8xbf16>, vector<8x128xbf16>, vector<8x128xf32> -> vector<8x128xf32>
    %c0_3 = arith.constant 0 : index
    %c0_4 = arith.constant 0 : index
    %4 = vector.load %arg3[%c0_3, %c0_4] : memref<1x128xf32, #tpu.memory_space<vmem>>, vector<1x128xf32>
    %5 = vector.broadcast %4 : vector<1x128xf32> to vector<8x128xf32>
    %6 = arith.addf %3, %5 : vector<8x128xf32>
    %cst_5 = arith.constant 0.000000e+00 : f32
    %7 = vector.broadcast %cst_5 : f32 to vector<8x128xf32>
    %8 = arith.maximumf %6, %7 : vector<8x128xf32>
    %9 = arith.truncf %8 : vector<8x128xf32> to vector<8x128xbf16>
    %c0_6 = arith.constant 0 : index
    %c0_7 = arith.constant 0 : index
    %10 = vector.load %arg4[%c0_6, %c0_7] : memref<128x128xbf16, #tpu.memory_space<vmem>>, vector<128x128xbf16>
    %cst_8 = arith.constant dense<0.000000e+00> : vector<8x128xf32>
    %11 = tpu.matmul %9, %10, %cst_8 {dimension_numbers = #tpu.dot_dimension_numbers<[1], [0], [0], [1], [0, 0, 1, 1], [], []>} : vector<8x128xbf16>, vector<128x128xbf16>, vector<8x128xf32> -> vector<8x128xf32>
    %12 = vector.extract_strided_slice %11 {offsets = [0, 0], sizes = [8, 4], strides = [1, 1]} : vector<8x128xf32> to vector<8x4xf32>
    %c0_9 = arith.constant 0 : index
    %c0_10 = arith.constant 0 : index
    %13 = vector.load %arg5[%c0_9, %c0_10] : memref<1x4xf32, #tpu.memory_space<vmem>>, vector<1x4xf32>
    %14 = vector.broadcast %13 : vector<1x4xf32> to vector<8x4xf32>
    %15 = arith.addf %12, %14 : vector<8x4xf32>
    %c0_11 = arith.constant 0 : index
    %c0_12 = arith.constant 0 : index
    %16 = vector.load %arg6[%c0_11, %c0_12] : memref<8x4xf32, #tpu.memory_space<vmem>>, vector<8x4xf32>
    tpu.vector_store %arg6[%c0_11, %c0_12], %15 {strides = array<i32>} : memref<8x4xf32, #tpu.memory_space<vmem>>, vector<8x4xf32>,
    return
  }
  func.func @transform_0(%arg0: i32) -> (i32, i32) {
    %c0_i32 = arith.constant 0 : i32
    %c0_i32_0 = arith.constant 0 : i32
    return %arg0, %c0_i32 : i32, i32
  }
  func.func @transform_1(%arg0: i32) -> (i32, i32) {
    %c0_i32 = arith.constant 0 : i32
    %c0_i32_0 = arith.constant 0 : i32
    %c0_i32_1 = arith.constant 0 : i32
    return %c0_i32, %c0_i32_0 : i32, i32
  }
  func.func @transform_2(%arg0: i32) -> (i32, i32) {
    %c0_i32 = arith.constant 0 : i32
    %c0_i32_0 = arith.constant 0 : i32
    %c0_i32_1 = arith.constant 0 : i32
    return %c0_i32, %c0_i32_0 : i32, i32
  }
  func.func @transform_3(%arg0: i32) -> (i32, i32) {
    %c0_i32 = arith.constant 0 : i32
    %c0_i32_0 = arith.constant 0 : i32
    %c0_i32_1 = arith.constant 0 : i32
    return %c0_i32, %c0_i32_0 : i32, i32
  }
  func.func @transform_4(%arg0: i32) -> (i32, i32) {
    %c0_i32 = arith.constant 0 : i32
    %c0_i32_0 = arith.constant 0 : i32
    %c0_i32_1 = arith.constant 0 : i32
    return %c0_i32, %c0_i32_0 : i32, i32
  }
  func.func @transform_5(%arg0: i32) -> (i32, i32) {
    %c0_i32 = arith.constant 0 : i32
    %c0_i32_0 = arith.constant 0 : i32
    return %arg0, %c0_i32 : i32, i32
  }
}

</mosaic_0001>

<llo_original>
// kernel: tpu_custom_call.1
$region0: #{tpu_custom_call.1}
  #allocation0 [shape = 'u32[]', space=smem, size = 0x4, offset = 0x4, fixed_abs, tag = 'smem constant byte address 0x4 - core index']
  #allocation1 [shape = 'u32[144,128]{1,0:T(1,128)}', space=vmem, size = 0x12000, scoped, tag = 'internal scratch']
  %s0 = inlined_call_operand.vmem [shape: f32[16,8], index: 0, kind: input, shape index: {}]
  %s1 = inlined_call_operand.vmem [shape: bf16[8,128], index: 1, kind: input, shape index: {}]
  %s2 = inlined_call_operand.vmem [shape: f32[1,128], index: 2, kind: input, shape index: {}]
  %s3 = inlined_call_operand.hbm [shape: bf16[128,128], index: 3, kind: input, shape index: {}]
  %s4 = inlined_call_operand.vmem [shape: f32[1,4], index: 4, kind: input, shape index: {}]
  %s5 = inlined_call_operand.vmem [shape: f32[16,4], index: 5, kind: output, shape index: {}]
  %s6 = sld [smem:[#allocation0]]
  $region57: #{tpu_custom_call.1} parent=0
    _
  %s8 = ssub.s32 1, %s6
  %s9 = scalar_select 0, %s8, %s6
  $region1: #{tpu_custom_call.1} parent=0
    #allocation2 [shape = 'u8[32768]{0}', space=vmem, size = 0x8000, scoped, tag = 'input window, operand 3, single buffered']
    #allocation3 [shape = 's32[2]{0}', space=sflag, size = 0x8, scoped, tag = 'scoped memory for tpu_custom_call.1']
    %10 = vsyncpa [#allocation3], 0
    loop: start=0, step=1, limit=4
    $region2: #{tpu_custom_call.1} parent=1 // loop_pre_header
      _
    $region3: #{tpu_custom_call.1} parent=1 // loop_header
      %s12 = sphi 0, %s16
      %p13 = scmp.ge.s32.totalorder %s12, 4
      %s22 = sphi 0, %s24
      %s25 = sphi 0, %s22
      %s26 = sphi 0, %s25
      %s42 = sphi 0, %s26
      %s46 = sphi 0, %s46
      %s48 = sphi 0, %s46
      %s49 = sphi 0, %s48
      %s63 = sphi 0, %s49
      %s67 = sphi 0, %s67
      %s69 = sphi 0, %s67
      %s70 = sphi 0, %s69
      %s84 = sphi 0, %s70
      %s88 = sphi 0, %s88
      %s90 = sphi 0, %s88
      %s91 = sphi 0, %s90
      %s105 = sphi 0, %s91
      %s109 = sphi 0, %s109
      %s111 = sphi 0, %s109
      %s112 = sphi 0, %s111
      %s126 = sphi 0, %s112
      %s132 = sphi 0, %s134
      %s135 = sphi 0, %s132
      %s136 = sphi 0, %s135
      %s152 = sphi 0, %s136
    $region4: #{tpu_custom_call.1} parent=1 // loop_header_branch
      %15 = sbr.rel (%p13) target = $region8
    $region5: #{tpu_custom_call.1} parent=1 // loop_body
      %s17 = ssub.s32 %s12, 1
      %s18 = ssub.s32 %s12, 2
      %s19 = sadd.s32 %s12, 1
      %s20 = ssub.s32 %s12, %s19
      %p21 = scmp.eq.s32.totalorder %s20, 0
      %s23 = sadd.s32 %s22, 1
      %s24 = scalar_select %p21, %s22, %s23
      %p27 = pneg %p21
      %p28 = scmp.eq.s32.totalorder %s12, 1
      %p29 = por %p27, %p28
      %p30 = scmp.ne.s32.totalorder %s22, %s25
      %p31 = scmp.eq.s32.totalorder %s12, 0
      %p32 = por %p30, %p31
      %p33 = scmp.ne.s32.totalorder %s22, %s25
      %p34 = scmp.eq.s32.totalorder %s17, 1
      %p35 = por %p33, %p34
      %p36 = scmp.ne.s32.totalorder %s25, %s26
      %p37 = scmp.eq.s32.totalorder %s17, 0
      %p38 = por %p36, %p37
      %p39 = scmp.ne.s32.totalorder %s25, %s26
      %p40 = scmp.eq.s32.totalorder %s18, 1
      %p41 = por %p39, %p40
      %p43 = scmp.ne.s32.totalorder %s26, %s42
      %p44 = scmp.eq.s32.totalorder %s18, 0
      %p45 = por %p43, %p44
      %s47 = sadd.s32 %s46, 1
      %p50 = scmp.eq.s32.totalorder %s12, 1
      %p51 = scmp.ne.s32.totalorder %s46, %s48
      %p52 = scmp.eq.s32.totalorder %s12, 0
      %p53 = por %p51, %p52
      %p54 = scmp.ne.s32.totalorder %s46, %s48
      %p55 = scmp.eq.s32.totalorder %s17, 1
      %p56 = por %p54, %p55
      %p57 = scmp.ne.s32.totalorder %s48, %s49
      %p58 = scmp.eq.s32.totalorder %s17, 0
      %p59 = por %p57, %p58
      %p60 = scmp.ne.s32.totalorder %s48, %s49
      %p61 = scmp.eq.s32.totalorder %s18, 1
      %p62 = por %p60, %p61
      %p64 = scmp.ne.s32.totalorder %s49, %s63
      %p65 = scmp.eq.s32.totalorder %s18, 0
      %p66 = por %p64, %p65
      %s68 = sadd.s32 %s67, 1
      %p71 = scmp.eq.s32.totalorder %s12, 1
      %p72 = scmp.ne.s32.totalorder %s67, %s69
      %p73 = scmp.eq.s32.totalorder %s12, 0
      %p74 = por %p72, %p73
      %p75 = scmp.ne.s32.totalorder %s67, %s69
      %p76 = scmp.eq.s32.totalorder %s17, 1
      %p77 = por %p75, %p76
      %p78 = scmp.ne.s32.totalorder %s69, %s70
      %p79 = scmp.eq.s32.totalorder %s17, 0
      %p80 = por %p78, %p79
      %p81 = scmp.ne.s32.totalorder %s69, %s70
      %p82 = scmp.eq.s32.totalorder %s18, 1
      %p83 = por %p81, %p82
      %p85 = scmp.ne.s32.totalorder %s70, %s84
      %p86 = scmp.eq.s32.totalorder %s18, 0
      %p87 = por %p85, %p86
      %s89 = sadd.s32 %s88, 1
      %p92 = scmp.eq.s32.totalorder %s12, 1
      %p93 = scmp.ne.s32.totalorder %s88, %s90
      %p94 = scmp.eq.s32.totalorder %s12, 0
      %p95 = por %p93, %p94
      %p96 = scmp.ne.s32.totalorder %s88, %s90
      %p97 = scmp.eq.s32.totalorder %s17, 1
      %p98 = por %p96, %p97
      %p99 = scmp.ne.s32.totalorder %s90, %s91
      %p100 = scmp.eq.s32.totalorder %s17, 0
      %p101 = por %p99, %p100
      %p102 = scmp.ne.s32.totalorder %s90, %s91
      %p103 = scmp.eq.s32.totalorder %s18, 1
      %p104 = por %p102, %p103
      %p106 = scmp.ne.s32.totalorder %s91, %s105
      %p107 = scmp.eq.s32.totalorder %s18, 0
      %p108 = por %p106, %p107
      %s110 = sadd.s32 %s109, 1
      %p113 = scmp.eq.s32.totalorder %s12, 1
      %p114 = scmp.ne.s32.totalorder %s109, %s111
      %p115 = scmp.eq.s32.totalorder %s12, 0
      %p116 = por %p114, %p115
      %p117 = scmp.ne.s32.totalorder %s109, %s111
      %p118 = scmp.eq.s32.totalorder %s17, 1
      %p119 = por %p117, %p118
      %p120 = scmp.ne.s32.totalorder %s111, %s112
      %p121 = scmp.eq.s32.totalorder %s17, 0
      %p122 = por %p120, %p121
      %p123 = scmp.ne.s32.totalorder %s111, %s112
      %p124 = scmp.eq.s32.totalorder %s18, 1
      %p125 = por %p123, %p124
      %p127 = scmp.ne.s32.totalorder %s112, %s126
      %p128 = scmp.eq.s32.totalorder %s18, 0
      %p129 = por %p127, %p128
      %s130 = ssub.s32 %s12, %s19
      %p131 = scmp.eq.s32.totalorder %s130, 0
      %s133 = sadd.s32 %s132, 1
      %s134 = scalar_select %p131, %s132, %s133
      %p137 = pneg %p131
      %p138 = scmp.eq.s32.totalorder %s12, 1
      %p139 = por %p137, %p138
      %p140 = scmp.ne.s32.totalorder %s132, %s135
      %p141 = scmp.eq.s32.totalorder %s12, 0
      %p142 = por %p140, %p141
      %p143 = scmp.ne.s32.totalorder %s132, %s135
      %p144 = scmp.eq.s32.totalorder %s17, 1
      %p145 = por %p143, %p144
      %p146 = scmp.ne.s32.totalorder %s135, %s136
      %p147 = scmp.eq.s32.totalorder %s17, 0
      %p148 = por %p146, %p147
      %p149 = scmp.ne.s32.totalorder %s135, %s136
      %p150 = scmp.eq.s32.totalorder %s18, 1
      %p151 = por %p149, %p150
      %p153 = scmp.ne.s32.totalorder %s136, %s152
      %p154 = scmp.eq.s32.totalorder %s18, 0
      %p155 = por %p153, %p154
      %p156 = scmp.le.s32.totalorder 1, %s12
      %p157 = scmp.lt.s32.totalorder %s12, 3
      %p158 = pnand %p156, %p157
      %p159 = pneg %p158
      // Predicated region
      $region9: #{tpu_custom_call.1} parent=5 // pred_check
        _
      $region10: #{tpu_custom_call.1} parent=5 // pred_check_branch
        %161 = sbr.rel (%p158) target = $region12
      $region11: #{tpu_custom_call.1} parent=5 // pred_region
        %s162 = ssub.s32 %s12, 1
        // Predicated region
        $region13: #{tpu_custom_call.1} parent=11 // pred_check
          %p163 = pneg %p59
        $region14: #{tpu_custom_call.1} parent=11 // pred_check_branch
          %165 = sbr.rel (%p163) target = $region16
        $region15: #{tpu_custom_call.1} parent=11 // pred_region
          _
        $region16: #{tpu_custom_call.1} parent=11 // pred_fallthru
          _
        // Predicated region
        $region17: #{tpu_custom_call.1} parent=11 // pred_check
          %p166 = pneg %p80
        $region18: #{tpu_custom_call.1} parent=11 // pred_check_branch
          %168 = sbr.rel (%p166) target = $region20
        $region19: #{tpu_custom_call.1} parent=11 // pred_region
          _
        $region20: #{tpu_custom_call.1} parent=11 // pred_fallthru
          _
        // Predicated region
        $region21: #{tpu_custom_call.1} parent=11 // pred_check
          %p169 = pneg %p101
        $region22: #{tpu_custom_call.1} parent=11 // pred_check_branch
          %171 = sbr.rel (%p169) target = $region24
        $region23: #{tpu_custom_call.1} parent=11 // pred_region
          %s173 = ssub.s32 1024, 1024
          %174 = vsyncadd [#allocation3], %s173
          %s175 = sshll.u32 [#allocation2], 4
          %s176 = int_to_ptr.vmem [resolvable:$true] %s175
          %181 = dma.hbm_to_vmem [thread:$0]  %s3, 1024, %s176, [#allocation3], 64, 64, 4
        $region24: #{tpu_custom_call.1} parent=11 // pred_fallthru
          _
        // Predicated region
        $region25: #{tpu_custom_call.1} parent=11 // pred_check
          %p182 = pneg %p122
        $region26: #{tpu_custom_call.1} parent=11 // pred_check_branch
          %184 = sbr.rel (%p182) target = $region28
        $region27: #{tpu_custom_call.1} parent=11 // pred_region
          _
        $region28: #{tpu_custom_call.1} parent=11 // pred_fallthru
          _
      $region12: #{tpu_custom_call.1} parent=5 // pred_fallthru
        _
      %p185 = scmp.lt.s32.totalorder %s12, 2
      // Predicated region
      $region29: #{tpu_custom_call.1} parent=5 // pred_check
        %p186 = pneg %p185
      $region30: #{tpu_custom_call.1} parent=5 // pred_check_branch
        %188 = sbr.rel (%p186) target = $region32
      $region31: #{tpu_custom_call.1} parent=5 // pred_region
        // Predicated region
        $region33: #{tpu_custom_call.1} parent=31 // pred_check
          %p189 = pneg %p32
        $region34: #{tpu_custom_call.1} parent=31 // pred_check_branch
          %191 = sbr.rel (%p189) target = $region36
        $region35: #{tpu_custom_call.1} parent=31 // pred_region
          %p192 = scmp.lt.s32.totalorder %s12, 1
          %s193 = scalar_select %p192, %s12, 1
          %s194 = smul.addr %s193, 8
          %s195 = scalar_lea.vmem %s0, %s194
        $region36: #{tpu_custom_call.1} parent=31 // pred_fallthru
          _
      $region32: #{tpu_custom_call.1} parent=5 // pred_fallthru
        _
      %p196 = scmp.le.s32.totalorder 1, %s12
      %p197 = scmp.lt.s32.totalorder %s12, 3
      %p198 = pnand %p196, %p197
      %p199 = pneg %p198
      // Predicated region
      $region37: #{tpu_custom_call.1} parent=5 // pred_check
        _
      $region38: #{tpu_custom_call.1} parent=5 // pred_check_branch
        %201 = sbr.rel (%p198) target = $region40
      $region39: #{tpu_custom_call.1} parent=5 // pred_region
        %s202 = ssub.s32 %s12, 1
        // Predicated region
        $region41: #{tpu_custom_call.1} parent=39 // pred_check
          %p203 = pneg %p101
        $region42: #{tpu_custom_call.1} parent=39 // pred_check_branch
          %205 = sbr.rel (%p203) target = $region44
        $region43: #{tpu_custom_call.1} parent=39 // pred_region
          %206 = dma.done [#allocation3], 1024
        $region44: #{tpu_custom_call.1} parent=39 // pred_fallthru
          _
        %p207 = scmp.lt.s32.totalorder %s17, 1
        %s208 = scalar_select %p207, %s17, 1
        %s209 = smul.addr %s208, 8
        %s210 = scalar_lea.vmem %s0, %s209
        %p211 = pneg %p38
        %p212 = pneg %p35
        %p213 = pneg %p59
        %p214 = pneg %p56
        %p215 = pneg %p80
        %p216 = pneg %p77
        %p217 = pneg %p101
        %p218 = pneg %p98
        %p219 = pneg %p122
        %p220 = pneg %p119
        %p221 = pneg %p148
        %p222 = pneg %p145
        %p223 = scmp.lt.s32.totalorder %s17, 1
        %s224 = scalar_select %p223, %s17, 1
        %s225 = smul.addr %s224, 8
        %s226 = scalar_lea.vmem %s5, %s225
        %p227 = scmp.lt.s32.totalorder %s17, 1
        %s228 = scalar_select %p227, %s17, 1
        %s229 = smul.addr %s228, 8
        %s230 = scalar_lea.vmem %s0, %s229
        %p231 = scmp.lt.s32.totalorder %s17, 1
        %s232 = scalar_select %p231, %s17, 1
        %s233 = smul.addr %s232, 8
        %s234 = scalar_lea.vmem %s5, %s233
        %v236 = vld [vmem:[%s230] sm:$0xff]
        %v237 = vpack.c.bf16 %v236, %v236
        %v238 = vld [vmem:[%s1] sm:$0xf]
        %v239 = vld [vmem:[%s2] sm:$0x1]
        %v241 = vlaneseq
        %v242 = vshrl.u32 %v241, 7
        %v243 = vsub.s32 0, %v242
        %v244 = vrot.slane %v239, %v243
        %vm246 = vcmask 64512
        %v248 = vsel %vm246, %v237, 0
        %vm250 = vcmask 1043456
        %v252 = vsel %vm250, %v238, 0
        %254 = vmatprep.subr.bf16.mxu0 0
        %255 = vmatpush1.bf16.msra.mxu0 0
        %256 = vmatprep.subr.bf16.mxu0 0
        %257 = vmatpush1.bf16.msra.mxu0 0
        %258 = vmatprep.subr.bf16.mxu0 0
        %259 = vmatpush1.bf16.msra.mxu0 0
        %260 = vmatprep.subr.bf16.mxu0 0
        %261 = vmatpush1.bf16.msra.mxu0 0
        %262 = vmatprep.subr.bf16.mxu0 0
        %263 = vmatpush1.bf16.msra.mxu0 0
        %264 = vmatprep.subr.bf16.mxu0 0
        %265 = vmatpush1.bf16.msra.mxu0 0
        %266 = vmatprep.subr.bf16.mxu0 0
        %267 = vmatpush1.bf16.msra.mxu0 0
        %268 = vmatprep.subr.bf16.mxu0 0
        %269 = vmatpush1.bf16.msra.mxu0 %v252
        %270 = vmatprep.subr.bf16.mxu0 0
        %271 = vmatpush2.bf16.msra.mxu0 0
        %272 = vmatprep.subr.bf16.mxu0 0
        %273 = vmatpush2.bf16.msra.mxu0 0
        %274 = vmatprep.subr.bf16.mxu0 0
        %275 = vmatpush2.bf16.msra.mxu0 0
        %276 = vmatprep.subr.bf16.mxu0 0
        %277 = vmatpush2.bf16.msra.mxu0 0
        %278 = vmatprep.subr.bf16.mxu0 0
        %279 = vmatpush2.bf16.msra.mxu0 0
        %280 = vmatprep.subr.bf16.mxu0 0
        %281 = vmatpush2.bf16.msra.mxu0 0
        %282 = vmatprep.subr.bf16.mxu0 0
        %283 = vmatpush2.bf16.msra.mxu0 0
        %284 = vmatprep.subr.bf16.mxu0 0
        %285 = vmatpush2.bf16.msra.mxu0 0
        %286 = vmatprep.mubr.bf16.mxu0 0
        %287 = vmatmul.mubr.bf16.gmra.mxu0 %v248
        %v288 = vpop.f32.mrf.mxu0
        %v289 = vadd.f32 %v244, %v288
        %v290 = vpop.f32.mrf.mxu0
        %v291 = vpop.f32.mrf.mxu0
        %v292 = vpop.f32.mrf.mxu0
        %293 = vdwg.mxu0
        %v294 = vmax.f32 %v289, 0.0
        %v295 = vpack.c.bf16 %v294, %v294
        %v296 = vld [vmem:[#allocation2] sm:$0xf]
        %v297 = vld [vmem:[#allocation2 + $0x4] sm:$0xf]
        %v298 = vld [vmem:[#allocation2 + $0x8] sm:$0xf]
        %v299 = vld [vmem:[#allocation2 + $0xc] sm:$0xf]
        %v300 = vld [vmem:[#allocation2 + $0x10] sm:$0xf]
        %v301 = vld [vmem:[#allocation2 + $0x14] sm:$0xf]
        %v302 = vld [vmem:[#allocation2 + $0x18] sm:$0xf]
        %v303 = vld [vmem:[#allocation2 + $0x1c] sm:$0xf]
        %v304 = vld [vmem:[#allocation2 + $0x20] sm:$0xf]
        %v305 = vld [vmem:[#allocation2 + $0x24] sm:$0xf]
        %v306 = vld [vmem:[#allocation2 + $0x28] sm:$0xf]
        %v307 = vld [vmem:[#allocation2 + $0x2c] sm:$0xf]
        %v308 = vld [vmem:[#allocation2 + $0x30] sm:$0xf]
        %v309 = vld [vmem:[#allocation2 + $0x34] sm:$0xf]
        %v310 = vld [vmem:[#allocation2 + $0x38] sm:$0xf]
        %v311 = vld [vmem:[#allocation2 + $0x3c] sm:$0xf]
        %v328 = vunpack.c.l.b16 %v296
        %v329 = vunpack.c.l.b16 %v297
        %v330 = vunpack.c.l.b16 %v298
        %v331 = vunpack.c.l.b16 %v299
        %v332 = vunpack.c.l.b16 %v300
        %v333 = vunpack.c.l.b16 %v301
        %v334 = vunpack.c.l.b16 %v302
        %v335 = vunpack.c.l.b16 %v303
        %v336 = vunpack.c.l.b16 %v304
        %v337 = vunpack.c.l.b16 %v305
        %v338 = vunpack.c.l.b16 %v306
        %v339 = vunpack.c.l.b16 %v307
        %v340 = vunpack.c.l.b16 %v308
        %v341 = vunpack.c.l.b16 %v309
        %v342 = vunpack.c.l.b16 %v310
        %v343 = vunpack.c.l.b16 %v311
        %v344 = vpack.c.b16 %v329, %v328
        %v345 = vpack.c.b16 %v331, %v330
        %v346 = vpack.c.b16 %v333, %v332
        %v347 = vpack.c.b16 %v335, %v334
        %v348 = vpack.c.b16 %v337, %v336
        %v349 = vpack.c.b16 %v339, %v338
        %v350 = vpack.c.b16 %v341, %v340
        %v351 = vpack.c.b16 %v343, %v342
        %360 = vmatprep.subr.bf16.mxu0 0
        %361 = vmatpush1.bf16.msra.mxu0 %v351
        %362 = vmatprep.subr.bf16.mxu0 0
        %363 = vmatpush1.bf16.msra.mxu0 %v350
        %364 = vmatprep.subr.bf16.mxu0 0
        %365 = vmatpush1.bf16.msra.mxu0 %v349
        %366 = vmatprep.subr.bf16.mxu0 0
        %367 = vmatpush1.bf16.msra.mxu0 %v348
        %368 = vmatprep.subr.bf16.mxu0 0
        %369 = vmatpush1.bf16.msra.mxu0 %v347
        %370 = vmatprep.subr.bf16.mxu0 0
        %371 = vmatpush1.bf16.msra.mxu0 %v346
        %372 = vmatprep.subr.bf16.mxu0 0
        %373 = vmatpush1.bf16.msra.mxu0 %v345
        %374 = vmatprep.subr.bf16.mxu0 0
        %375 = vmatpush1.bf16.msra.mxu0 %v344
        %376 = vmatprep.subr.bf16.mxu0 0
        %377 = vmatpush2.bf16.msra.mxu0 0
        %378 = vmatprep.subr.bf16.mxu0 0
        %379 = vmatpush2.bf16.msra.mxu0 0
        %380 = vmatprep.subr.bf16.mxu0 0
        %381 = vmatpush2.bf16.msra.mxu0 0
        %382 = vmatprep.subr.bf16.mxu0 0
        %383 = vmatpush2.bf16.msra.mxu0 0
        %384 = vmatprep.subr.bf16.mxu0 0
        %385 = vmatpush2.bf16.msra.mxu0 0
        %386 = vmatprep.subr.bf16.mxu0 0
        %387 = vmatpush2.bf16.msra.mxu0 0
        %388 = vmatprep.subr.bf16.mxu0 0
        %389 = vmatpush2.bf16.msra.mxu0 0
        %390 = vmatprep.subr.bf16.mxu0 0
        %391 = vmatpush2.bf16.msra.mxu0 0
        %392 = vmatprep.mubr.bf16.mxu0 0
        %393 = vmatmul.mubr.bf16.gmra.mxu0 %v295
        %v394 = vpop.f32.mrf.mxu0
        %v395 = vadd.f32 0.0, %v394
        %v396 = vpop.f32.mrf.mxu0
        %v397 = vpop.f32.mrf.mxu0
        %v398 = vpop.f32.mrf.mxu0
        %399 = vdwg.mxu0
        %v400 = vld [vmem:[%s4] sm:$0x1]
        %v402 = vlaneseq
        %v403 = vshrl.u32 %v402, 7
        %v404 = vsub.s32 0, %v403
        %v405 = vrot.slane %v400, %v404
        %v407 = vadd.f32 %v395, %v405
        %vm408 = vcmask 31744
        %409 = vst.msk [vmem:[%s234] sm:$0xff] %vm408, %v407
        %p410 = scmp.lt.s32.totalorder %s17, 1
        %s411 = scalar_select %p410, %s17, 1
        %s412 = smul.addr %s411, 8
        %s413 = scalar_lea.vmem %s5, %s412
        // Predicated region
        $region45: #{tpu_custom_call.1} parent=39 // pred_check
          %p414 = pneg %p145
        $region46: #{tpu_custom_call.1} parent=39 // pred_check_branch
          %416 = sbr.rel (%p414) target = $region48
        $region47: #{tpu_custom_call.1} parent=39 // pred_region
          _
        $region48: #{tpu_custom_call.1} parent=39 // pred_fallthru
          _
      $region40: #{tpu_custom_call.1} parent=5 // pred_fallthru
        _
      %p417 = scmp.le.s32.totalorder 2, %s12
      // Predicated region
      $region49: #{tpu_custom_call.1} parent=5 // pred_check
        %p418 = pneg %p417
      $region50: #{tpu_custom_call.1} parent=5 // pred_check_branch
        %420 = sbr.rel (%p418) target = $region52
      $region51: #{tpu_custom_call.1} parent=5 // pred_region
        %s421 = ssub.s32 %s12, 2
        // Predicated region
        $region53: #{tpu_custom_call.1} parent=51 // pred_check
          %p422 = pneg %p151
        $region54: #{tpu_custom_call.1} parent=51 // pred_check_branch
          %424 = sbr.rel (%p422) target = $region56
        $region55: #{tpu_custom_call.1} parent=51 // pred_region
          %p425 = scmp.lt.s32.totalorder %s18, 1
          %s426 = scalar_select %p425, %s18, 1
          %s427 = smul.addr %s426, 8
          %s428 = scalar_lea.vmem %s5, %s427
        $region56: #{tpu_custom_call.1} parent=51 // pred_fallthru
          _
      $region52: #{tpu_custom_call.1} parent=5 // pred_fallthru
        _
    $region6: #{tpu_custom_call.1} parent=1 // loop_footer
      %s16 = sadd.s32 1, %s12
    $region7: #{tpu_custom_call.1} parent=1 // loop_footer_branch
      %11 = sbr.rel target = $region3
    $region8: #{tpu_custom_call.1} parent=1 // loop_exit
      _
    %429 = vsyncpa [#allocation3], 1
    %s430 = scalar_lea.sflag [#allocation3], 1
    %431 = vsyncpa %s430, 1

</llo_original>
